<compile_context>
chip_gen: v6e
topology: v6e:2x2x1
jax: 0.10.0
libtpu: 0.0.40
codegen_flags: <defaults>
</compile_context>

<pallas_src>
import jax
import jax.numpy as jnp
from jax.experimental import pallas as pl
from jax.experimental.pallas import tpu as pltpu


def _fma_kernel(x_ref, y_ref, o_ref):
    # fused elementwise hot path:  out = x * y + x   (VPU work is free filler
    # under the HBM stall; keep it minimal, no extra casts/broadcasts)
    x = x_ref[...]
    y = y_ref[...]
    o_ref[...] = x * y + x


# Below this many bytes per input the kernel is overhead-dominated: run it as
# a single whole-array block with grid=(1,).
_SMALL_BYTES = 512 * 1024
# ~1 MiB per input block for the tiled path:
#   3 arrays x 2 double-buffers x 1 MiB = 6 MiB  < 16 MiB (v5e scoped VMEM).
_TARGET_BLOCK_BYTES = 1 << 20
# Prefer the widest lane-dense last dim that divides the flat size.
_LANE_CANDIDATES = (4096, 2048, 1024, 512, 256, 128)


def _single_block_call(x2, y2):
    """Whole (2-D) array as one block; grid=(1,), no padding, no grid loop."""
    rows, cols = x2.shape
    idx = lambda i: (0, 0)
    return pl.pallas_call(
        _fma_kernel,
        out_shape=jax.ShapeDtypeStruct((rows, cols), x2.dtype),
        grid_spec=pltpu.PrefetchScalarGridSpec(
            num_scalar_prefetch=0,
            grid=(1,),
            in_specs=[pl.BlockSpec((rows, cols), idx),
                      pl.BlockSpec((rows, cols), idx)],
            out_specs=pl.BlockSpec((rows, cols), idx),
        ),
        compiler_params=pltpu.CompilerParams(
            dimension_semantics=("arbitrary",)
        ),
    )(x2, y2)


def _tiled_call(xf, yf, tile_rows):
    """Lane-dense (R, C) slab tiled over rows with large blocks."""
    rows, lanes = xf.shape
    grid = (pl.cdiv(rows, tile_rows),)
    return pl.pallas_call(
        _fma_kernel,
        out_shape=jax.ShapeDtypeStruct((rows, lanes), xf.dtype),
        grid_spec=pltpu.PrefetchScalarGridSpec(
            num_scalar_prefetch=0,
            grid=grid,
            in_specs=[pl.BlockSpec((tile_rows, lanes), lambda i: (i, 0)),
                      pl.BlockSpec((tile_rows, lanes), lambda i: (i, 0))],
            out_specs=pl.BlockSpec((tile_rows, lanes), lambda i: (i, 0)),
        ),
        compiler_params=pltpu.CompilerParams(
            dimension_semantics=("parallel",)   # shards across TCs on v7x
        ),
    )(xf, yf)


def wrapper_module_forward(x, y):
    """Pallas implementation of WrapperModule(forward)(x, y) = x*y + x."""
    assert x.shape == y.shape and x.dtype == y.dtype
    orig_shape = x.shape
    n = x.size
    itemsize = jnp.dtype(x.dtype).itemsize
    nbytes = n * itemsize

    # ---- small path: one block, no padding, no per-step overhead ----------
    if nbytes <= _SMALL_BYTES:
        if n % 128 == 0:
            shp2 = (n // 128, 128)          # fully lane-dense
        else:
            shp2 = (1, n)                   # block == full dims -> rule waived
        out = _single_block_call(x.reshape(shp2), y.reshape(shp2))
        return out.reshape(orig_shape)

    # ---- large path: lane-dense slab, ~1 MiB blocks, no pad when possible -
    lanes = None
    for c in _LANE_CANDIDATES:
        if n % c == 0:
            lanes = c
            break

    padded = False
    if lanes is None:
        # rare ragged fallback: pad flat tail (zero pad is benign for x*y+x)
        lanes = 512
        n_pad = pl.cdiv(n, lanes) * lanes
        xf = jnp.pad(x.reshape(-1), (0, n_pad - n)).reshape(-1, lanes)
        yf = jnp.pad(y.reshape(-1), (0, n_pad - n)).reshape(-1, lanes)
        padded = True
    else:
        xf = x.reshape(-1, lanes)
        yf = y.reshape(-1, lanes)

    rows = xf.shape[0]
    # large power-of-two row tile (>=32 covers bf16/int8 sublane minimums)
    tile_rows = max(32, _TARGET_BLOCK_BYTES // (lanes * itemsize))
    if tile_rows >= rows:
        tile_rows = rows                    # single row-block == full dim

    out = _tiled_call(xf, yf, tile_rows)

    if padded:
        return out.reshape(-1)[:n].reshape(orig_shape)
    return out.reshape(orig_shape)


if __name__ == "__main__":
    key = jax.random.PRNGKey(0)
    kx, ky = jax.random.split(key)

    # small shapes consistent with the test's random float inputs
    x = jax.random.normal(kx, (2, 4, 16, 16), dtype=jnp.float32)
    y = jax.random.normal(ky, (2, 4, 16, 16), dtype=jnp.float32)
    out = wrapper_module_forward(x, y)
    jax.block_until_ready(out)
    ref = x * y + x
    assert jnp.allclose(out, ref, atol=1e-6, rtol=1e-6)

    # also exercise the large tiled (multi-block, lane-dense) path
    xb = jax.random.normal(kx, (256, 2048), dtype=jnp.float32)
    yb = jax.random.normal(ky, (256, 2048), dtype=jnp.float32)
    outb = wrapper_module_forward(xb, yb)
    jax.block_until_ready(outb)
    assert jnp.allclose(outb, xb * yb + xb, atol=1e-6, rtol=1e-6)

    print("KERNEL_OK")
</pallas_src>

<mosaic_0001>
module attributes {stable_mosaic.version = 11 : i64} {
  func.func @_fma_kernel(%arg0: i32, %arg1: memref<16x128xf32, #tpu.memory_space<vmem>>, %arg2: memref<16x128xf32, #tpu.memory_space<vmem>>, %arg3: memref<16x128xf32, #tpu.memory_space<vmem>>) attributes {dimension_semantics = [#tpu.dimension_semantics<arbitrary>], iteration_bounds = array<i64: 1>, scalar_prefetch = 0 : i64, scratch_operands = 0 : i64, tpu.core_type = #tpu.core_type<tc>, window_params = [{pipeline_mode = #tpu.pipeline_mode<synchronous>, transform_indices = @transform_0, window_bounds = array<i64: 16, 128>}, {pipeline_mode = #tpu.pipeline_mode<synchronous>, transform_indices = @transform_1, window_bounds = array<i64: 16, 128>}, {pipeline_mode = #tpu.pipeline_mode<synchronous>, transform_indices = @transform_2, window_bounds = array<i64: 16, 128>}]} {
    %c0 = arith.constant 0 : index
    %c0_0 = arith.constant 0 : index
    %0 = vector.load %arg1[%c0, %c0_0] : memref<16x128xf32, #tpu.memory_space<vmem>>, vector<16x128xf32>
    %c0_1 = arith.constant 0 : index
    %c0_2 = arith.constant 0 : index
    %1 = vector.load %arg2[%c0_1, %c0_2] : memref<16x128xf32, #tpu.memory_space<vmem>>, vector<16x128xf32>
    %2 = arith.mulf %0, %1 : vector<16x128xf32>
    %3 = arith.addf %2, %0 : vector<16x128xf32>
    %c0_3 = arith.constant 0 : index
    %c0_4 = arith.constant 0 : index
    %4 = vector.load %arg3[%c0_3, %c0_4] : memref<16x128xf32, #tpu.memory_space<vmem>>, vector<16x128xf32>
    tpu.vector_store %arg3[%c0_3, %c0_4], %3 {strides = array<i32>} : memref<16x128xf32, #tpu.memory_space<vmem>>, vector<16x128xf32>,
    return
  }
  func.func @transform_0(%arg0: i32) -> (i32, i32) {
    %c0_i32 = arith.constant 0 : i32
    %c0_i32_0 = arith.constant 0 : i32
    %c0_i32_1 = arith.constant 0 : i32
    return %c0_i32, %c0_i32_0 : i32, i32
  }
  func.func @transform_1(%arg0: i32) -> (i32, i32) {
    %c0_i32 = arith.constant 0 : i32
    %c0_i32_0 = arith.constant 0 : i32
    %c0_i32_1 = arith.constant 0 : i32
    return %c0_i32, %c0_i32_0 : i32, i32
  }
  func.func @transform_2(%arg0: i32) -> (i32, i32) {
    %c0_i32 = arith.constant 0 : i32
    %c0_i32_0 = arith.constant 0 : i32
    %c0_i32_1 = arith.constant 0 : i32
    return %c0_i32, %c0_i32_0 : i32, i32
  }
}

</mosaic_0001>

<llo_original>
// kernel: tpu_custom_call.1
$region0: #{tpu_custom_call.1}
  #allocation0 [shape = 'u32[]', space=smem, size = 0x4, offset = 0x4, fixed_abs, tag = 'smem constant byte address 0x4 - core index']
  #allocation1 [shape = 'u32[144,128]{1,0:T(1,128)}', space=vmem, size = 0x12000, scoped, tag = 'internal scratch']
  %s0 = inlined_call_operand.hbm [shape: f32[16,128], index: 0, kind: input, shape index: {}]
  %s1 = inlined_call_operand.hbm [shape: f32[16,128], index: 1, kind: input, shape index: {}]
  %s2 = inlined_call_operand.hbm [shape: f32[16,128], index: 2, kind: output, shape index: {}]
  %s3 = sld [smem:[#allocation0]]
  $region26: #{tpu_custom_call.1} parent=0
    _
  %s5 = ssub.s32 1, %s3
  %s6 = scalar_select 0, %s5, %s3
  $region1: #{tpu_custom_call.1} parent=0
    #allocation2 [shape = 'u8[8192]{0}', space=vmem, size = 0x2000, scoped, tag = 'input window, operand 0, single buffered']
    #allocation3 [shape = 's32[1]{0}', space=sflag, size = 0x4, scoped, tag = 'scoped memory for tpu_custom_call.1']
    #allocation4 [shape = 's32[1]{0}', space=sflag, size = 0x4, scoped, tag = 'scoped memory for tpu_custom_call.1']
    #allocation5 [shape = 'u8[8192]{0}', space=vmem, size = 0x2000, scoped, tag = 'input window, operand 1, single buffered']
    #allocation6 [shape = 's32[1]{0}', space=sflag, size = 0x4, scoped, tag = 'scoped memory for tpu_custom_call.1']
    #allocation7 [shape = 'u8[8192]{0}', space=vmem, size = 0x2000, scoped, tag = 'output window, operand 0, single buffered']
    %7 = vsyncpa [#allocation3], 0
    %8 = vsyncpa [#allocation6], 0
    %9 = vsyncpa [#allocation4], 0
    // Predicated region
    $region2: #{tpu_custom_call.1} parent=1 // pred_check
      _
    $region3: #{tpu_custom_call.1} parent=1 // pred_check_branch
      %11 = sbr.rel (0) target = $region5
    $region4: #{tpu_custom_call.1} parent=1 // pred_region
      %s13 = ssub.s32 256, 256
      %14 = vsyncadd [#allocation3], %s13
      %s15 = sshll.u32 [#allocation2], 4
      %s16 = int_to_ptr.vmem [resolvable:$true] %s15
      %21 = dma.hbm_to_vmem [thread:$0]  %s0, 256, %s16, [#allocation3], 128, 128, 8
    $region5: #{tpu_custom_call.1} parent=1 // pred_fallthru
      _
    // Predicated region
    $region6: #{tpu_custom_call.1} parent=1 // pred_check
      _
    $region7: #{tpu_custom_call.1} parent=1 // pred_check_branch
      %23 = sbr.rel (0) target = $region9
    $region8: #{tpu_custom_call.1} parent=1 // pred_region
      %s25 = ssub.s32 256, 256
      %26 = vsyncadd [#allocation6], %s25
      %s27 = sshll.u32 [#allocation5], 4
      %s28 = int_to_ptr.vmem [resolvable:$true] %s27
      %33 = dma.hbm_to_vmem [thread:$0]  %s1, 256, %s28, [#allocation6], 128, 128, 8
    $region9: #{tpu_custom_call.1} parent=1 // pred_fallthru
      _
    // Predicated region
    $region10: #{tpu_custom_call.1} parent=1 // pred_check
      _
    $region11: #{tpu_custom_call.1} parent=1 // pred_check_branch
      %35 = sbr.rel (0) target = $region13
    $region12: #{tpu_custom_call.1} parent=1 // pred_region
      %36 = dma.done [#allocation3], 256
    $region13: #{tpu_custom_call.1} parent=1 // pred_fallthru
      _
    // Predicated region
    $region14: #{tpu_custom_call.1} parent=1 // pred_check
      _
    $region15: #{tpu_custom_call.1} parent=1 // pred_check_branch
      %38 = sbr.rel (0) target = $region17
    $region16: #{tpu_custom_call.1} parent=1 // pred_region
      %39 = dma.done [#allocation6], 256
    $region17: #{tpu_custom_call.1} parent=1 // pred_fallthru
      _
    %v40 = vld [vmem:[#allocation2] sm:$0xff]
    %v41 = vld [vmem:[#allocation2 + $0x8] sm:$0xff]
    %v42 = vld [vmem:[#allocation5] sm:$0xff]
    %v43 = vld [vmem:[#allocation5 + $0x8] sm:$0xff]
    %v44 = vmul.f32 %v40, %v42
    %v45 = vmul.f32 %v41, %v43
    %v46 = vadd.f32 %v44, %v40
    %v47 = vadd.f32 %v45, %v41
    %48 = vst [vmem:[#allocation7] sm:$0xff] %v46
    %49 = vst [vmem:[#allocation7 + $0x8] sm:$0xff] %v47
    // Predicated region
    $region18: #{tpu_custom_call.1} parent=1 // pred_check
      _
    $region19: #{tpu_custom_call.1} parent=1 // pred_check_branch
      %51 = sbr.rel (0) target = $region21
    $region20: #{tpu_custom_call.1} parent=1 // pred_region
      %s53 = ssub.s32 256, 256
      %54 = vsyncadd [#allocation4], %s53
      %s55 = sshll.u32 [#allocation7], 4
      %s56 = int_to_ptr.vmem [resolvable:$true] %s55
      %61 = dma.vmem_to_hbm [thread:$0]  %s56, 256, %s2, [#allocation4], 128, 128, 8
    $region21: #{tpu_custom_call.1} parent=1 // pred_fallthru
      _
    // Predicated region
    $region22: #{tpu_custom_call.1} parent=1 // pred_check
      _
    $region23: #{tpu_custom_call.1} parent=1 // pred_check_branch
      %63 = sbr.rel (0) target = $region25
    $region24: #{tpu_custom_call.1} parent=1 // pred_region
      %64 = dma.done [#allocation4], 256
    $region25: #{tpu_custom_call.1} parent=1 // pred_fallthru
      _
    %65 = vsyncpa [#allocation3], 1
    %66 = vsyncpa [#allocation6], 1
    %67 = vsyncpa [#allocation4], 1

</llo_original>
